<compile_context>
chip_gen: v5e
topology: v5e:2x2
jax: 0.10.0
libtpu: 0.0.40
codegen_flags: <defaults>
</compile_context>

<pallas_src>
import functools

import jax
import jax.numpy as jnp
from jax.experimental import pallas as pl
from jax.experimental.pallas import tpu as pltpu


def _mm_gt_kernel(xa_ref, xb_ref, xc_ref, p_ref, flag_ref,
                  *, n_valid, n_pad, tm, tn):
    """One (i, j) output tile of p = x @ x, accumulated over grid axis k."""
    # Keep every program_id/num_programs at top level (outside pl.when bodies).
    i = pl.program_id(0)
    j = pl.program_id(1)
    k = pl.program_id(2)
    nk = pl.num_programs(2)

    @pl.when(k == 0)
    def _init():
        p_ref[...] = jnp.zeros_like(p_ref)

    # Accumulate directly into the VMEM-resident output tile (its block index
    # is constant across k) -- no scratch accumulator, no extra tile copy.
    p_ref[...] += jnp.dot(xa_ref[...], xb_ref[...],
                          preferred_element_type=jnp.float32)

    @pl.when(k == nk - 1)
    def _finalize():
        p = p_ref[...]
        if n_valid == n_pad:
            # No padding (static): skip all mask work.
            violation = xc_ref[...] <= p
        else:
            rows = jax.lax.broadcasted_iota(jnp.int32, (tm, tn), 0) + i * tm
            cols = jax.lax.broadcasted_iota(jnp.int32, (tm, tn), 1) + j * tn
            valid = jnp.logical_and(rows < n_valid, cols < n_valid)
            violation = jnp.logical_and(valid, xc_ref[...] <= p)
        ok = jnp.where(violation, 0.0, 1.0)   # 0.0 where x <= p in valid region
        flag_ref[...] = jnp.broadcast_to(jnp.min(ok), flag_ref.shape)


def _vmem_budget_bytes():
    """Generation-aware scoped-VMEM budget (leave ~25% headroom)."""
    phys = 128 * 1024 * 1024
    try:
        phys = int(pltpu.get_tpu_info().vmem_capacity_bytes)
    except Exception:
        pass  # no TPU visible (e.g. interpret mode) -> assume v5e/v6e class
    return max(32 * 1024 * 1024, min(96 * 1024 * 1024, (phys * 3) // 4))


def _plan_tiles(n_pad, budget):
    """Largest 128-multiple tiles dividing n_pad that fit the VMEM budget."""
    def live_bytes(tm, tn, tk):
        # f32, double-buffered A, B, x-compare and p tiles + flag tile.
        return 8 * (tm * tk + tk * tn + 2 * tm * tn) + 2 * 8 * 128 * 4

    divisors = [t for t in range(128, n_pad + 1, 128) if n_pad % t == 0]
    best_tm, best_tk = 128, 128
    for tm in divisors:
        if tm > 1024:
            continue
        for tk in divisors:
            if tk > 1024:
                continue
            if live_bytes(tm, tm, tk) > budget:
                continue
            if (tm, tk) > (best_tm, best_tk):
                best_tm, best_tk = tm, tk
    return best_tm, best_tm, best_tk


def model_forward(x, y=None):
    """JAX/Pallas equivalent of Model.forward(x, y). `y` is unused (as in torch)."""
    x = jnp.asarray(x, jnp.float32)
    n, m = x.shape
    assert n == m, "torch.mm(v1, v1) requires a square input"

    # Pad to a 128 multiple: lane-dense output, MXU-aligned tiles.
    n_pad = max(128, ((n + 127) // 128) * 128)
    x_pad = x if n_pad == n else jnp.pad(x, ((0, n_pad - n), (0, n_pad - n)))

    budget = _vmem_budget_bytes()
    tm, tn, tk = _plan_tiles(n_pad, budget)
    gm, gn, gk = n_pad // tm, n_pad // tn, n_pad // tk

    kernel = functools.partial(_mm_gt_kernel,
                               n_valid=n, n_pad=n_pad, tm=tm, tn=tn)

    p_pad, flags = pl.pallas_call(
        kernel,
        out_shape=(
            jax.ShapeDtypeStruct((n_pad, n_pad), jnp.float32),      # p = x @ x
            jax.ShapeDtypeStruct((gm * 8, gn * 128), jnp.float32),  # per-tile flags
        ),
        grid_spec=pltpu.PrefetchScalarGridSpec(
            num_scalar_prefetch=0,
            grid=(gm, gn, gk),
            in_specs=[
                pl.BlockSpec((tm, tk), lambda i, j, k: (i, k)),  # A operand of x@x
                pl.BlockSpec((tk, tn), lambda i, j, k: (k, j)),  # B operand of x@x
                pl.BlockSpec((tm, tn), lambda i, j, k: (i, j)),  # x tile for compare
            ],
            out_specs=[
                pl.BlockSpec((tm, tn), lambda i, j, k: (i, j)),
                pl.BlockSpec((8, 128), lambda i, j, k: (i, j)),
            ],
        ),
        compiler_params=pltpu.CompilerParams(
            dimension_semantics=("parallel", "parallel", "arbitrary"),
            vmem_limit_bytes=budget,
        ),
    )(x_pad, x_pad, x_pad)

    p = p_pad[:n, :n]
    cond = jnp.min(flags) > 0.5  # all(v1 > v2), since v1 = x.T and v2 = (x @ x).T
    # `v2 if cond else v1`: only the selected array is transposed / materialized.
    return jax.lax.cond(cond, lambda: p.T, lambda: x.T)


def _reference(x):
    v1 = x.T
    v2 = jnp.dot(v1, v1, precision=jax.lax.Precision.HIGHEST)
    return jnp.where(jnp.all(v1 > v2), v2, v1)


if __name__ == "__main__":
    key = jax.random.PRNGKey(0)
    k1, k2, k3 = jax.random.split(key, 3)

    # Case 1: aligned size, random input (predicate False -> returns x.T).
    x1 = jax.random.normal(k1, (128, 128), dtype=jnp.float32)
    y1 = jax.random.normal(k2, (128, 128), dtype=jnp.float32)  # unused, parity only
    out1 = model_forward(x1, y1)
    jax.block_until_ready(out1)
    assert out1.shape == (128, 128)
    assert jnp.allclose(out1, _reference(x1), atol=2e-2, rtol=1e-3)

    # Case 2: unaligned size (exercises zero-padding + predicate masking).
    x2 = jax.random.normal(k3, (96, 96), dtype=jnp.float32)
    out2 = model_forward(x2, None)
    jax.block_until_ready(out2)
    assert out2.shape == (96, 96)
    assert jnp.allclose(out2, _reference(x2), atol=2e-2, rtol=1e-3)

    # Case 3: larger size and True branch: x = c * ones with c < 1/N gives
    # x > x @ x everywhere, so the kernel must return (x @ x).T.
    x3 = jnp.full((384, 384), 1.0 / 512.0, dtype=jnp.float32)
    out3 = model_forward(x3, None)
    jax.block_until_ready(out3)
    assert out3.shape == (384, 384)
    assert jnp.allclose(out3, _reference(x3), atol=2e-2, rtol=1e-3)

    print("KERNEL_OK")
</pallas_src>

<mosaic_0001>
module attributes {stable_mosaic.version = 11 : i64} {
  func.func @_mm_gt_kernel(%arg0: i32, %arg1: i32, %arg2: i32, %arg3: memref<128x128xf32, #tpu.memory_space<vmem>>, %arg4: memref<128x128xf32, #tpu.memory_space<vmem>>, %arg5: memref<128x128xf32, #tpu.memory_space<vmem>>, %arg6: memref<128x128xf32, #tpu.memory_space<vmem>>, %arg7: memref<8x128xf32, #tpu.memory_space<vmem>>) attributes {dimension_semantics = [#tpu.dimension_semantics<parallel>, #tpu.dimension_semantics<parallel>, #tpu.dimension_semantics<arbitrary>], iteration_bounds = array<i64: 1, 1, 1>, scalar_prefetch = 0 : i64, scratch_operands = 0 : i64, tpu.core_type = #tpu.core_type<tc>, window_params = [{transform_indices = @transform_0, window_bounds = array<i64: 128, 128>}, {transform_indices = @transform_1, window_bounds = array<i64: 128, 128>}, {transform_indices = @transform_2, window_bounds = array<i64: 128, 128>}, {transform_indices = @transform_3, window_bounds = array<i64: 128, 128>}, {transform_indices = @transform_4, window_bounds = array<i64: 8, 128>}]} {
    %c0_i32 = arith.constant 0 : i32
    %0 = arith.cmpi eq, %arg2, %c0_i32 : i32
    %1 = arith.extui %0 : i1 to i32
    %c0_i32_0 = arith.constant 0 : i32
    %2 = arith.cmpi ne, %1, %c0_i32_0 : i32
    scf.if %2 {
      %cst_10 = arith.constant 0.000000e+00 : f32
      %12 = vector.broadcast %cst_10 : f32 to vector<128x128xf32>
      %c0_11 = arith.constant 0 : index
      %c0_12 = arith.constant 0 : index
      %13 = vector.load %arg6[%c0_11, %c0_12] : memref<128x128xf32, #tpu.memory_space<vmem>>, vector<128x128xf32>
      tpu.vector_store %arg6[%c0_11, %c0_12], %12 {strides = array<i32>} : memref<128x128xf32, #tpu.memory_space<vmem>>, vector<128x128xf32>,
    } else {
    }
    %c0 = arith.constant 0 : index
    %c0_1 = arith.constant 0 : index
    %3 = vector.load %arg6[%c0, %c0_1] : memref<128x128xf32, #tpu.memory_space<vmem>>, vector<128x128xf32>
    %c0_2 = arith.constant 0 : index
    %c0_3 = arith.constant 0 : index
    %4 = vector.load %arg3[%c0_2, %c0_3] : memref<128x128xf32, #tpu.memory_space<vmem>>, vector<128x128xf32>
    %c0_4 = arith.constant 0 : index
    %c0_5 = arith.constant 0 : index
    %5 = vector.load %arg4[%c0_4, %c0_5] : memref<128x128xf32, #tpu.memory_space<vmem>>, vector<128x128xf32>
    %cst = arith.constant dense<0.000000e+00> : vector<128x128xf32>
    %6 = tpu.matmul %4, %5, %cst {dimension_numbers = #tpu.dot_dimension_numbers<[1], [0], [0], [1], [0, 0, 1, 1], [], []>} : vector<128x128xf32>, vector<128x128xf32>, vector<128x128xf32> -> vector<128x128xf32>
    %7 = arith.addf %3, %6 : vector<128x128xf32>
    %c0_6 = arith.constant 0 : index
    %c0_7 = arith.constant 0 : index
    %8 = vector.load %arg6[%c0_6, %c0_7] : memref<128x128xf32, #tpu.memory_space<vmem>>, vector<128x128xf32>
    tpu.vector_store %arg6[%c0_6, %c0_7], %7 {strides = array<i32>} : memref<128x128xf32, #tpu.memory_space<vmem>>, vector<128x128xf32>,
    %c0_i32_8 = arith.constant 0 : i32
    %9 = arith.cmpi eq, %arg2, %c0_i32_8 : i32
    %10 = arith.extui %9 : i1 to i32
    %c0_i32_9 = arith.constant 0 : i32
    %11 = arith.cmpi ne, %10, %c0_i32_9 : i32
    scf.if %11 {
      %c0_10 = arith.constant 0 : index
      %c0_11 = arith.constant 0 : index
      %12 = vector.load %arg6[%c0_10, %c0_11] : memref<128x128xf32, #tpu.memory_space<vmem>>, vector<128x128xf32>
      %c0_12 = arith.constant 0 : index
      %c0_13 = arith.constant 0 : index
      %13 = vector.load %arg5[%c0_12, %c0_13] : memref<128x128xf32, #tpu.memory_space<vmem>>, vector<128x128xf32>
      %14 = arith.cmpf ole, %13, %12 : vector<128x128xf32>
      %cst_14 = arith.constant 0.000000e+00 : f32
      %cst_15 = arith.constant 1.000000e+00 : f32
      %15 = vector.broadcast %cst_14 : f32 to vector<128x128xf32>
      %16 = vector.broadcast %cst_15 : f32 to vector<128x128xf32>
      %17 = arith.select %14, %15, %16 : vector<128x128xi1>, vector<128x128xf32>
      %18 = vector.shape_cast %17 : vector<128x128xf32> to vector<1x128x128xf32>
      %cst_16 = arith.constant dense<0x7F800000> : vector<1xf32>
      %19 = vector.multi_reduction <minimumf>, %18, %cst_16 [1, 2] : vector<1x128x128xf32> to vector<1xf32>
      %20 = vector.shape_cast %19 : vector<1xf32> to vector<1x1x1xf32>
      %21 = vector.extract %20[0, 0, 0] : f32 from vector<1x1x1xf32>
      %22 = vector.broadcast %21 : f32 to vector<8x128xf32>
      %c0_17 = arith.constant 0 : index
      %c0_18 = arith.constant 0 : index
      %23 = vector.load %arg7[%c0_17, %c0_18] : memref<8x128xf32, #tpu.memory_space<vmem>>, vector<8x128xf32>
      tpu.vector_store %arg7[%c0_17, %c0_18], %22 {strides = array<i32>} : memref<8x128xf32, #tpu.memory_space<vmem>>, vector<8x128xf32>,
    } else {
    }
    return
  }
  func.func @transform_0(%arg0: i32, %arg1: i32, %arg2: i32) -> (i32, i32) {
    %c0_i32 = arith.constant 0 : i32
    return %arg0, %arg2 : i32, i32
  }
  func.func @transform_1(%arg0: i32, %arg1: i32, %arg2: i32) -> (i32, i32) {
    %c0_i32 = arith.constant 0 : i32
    return %arg2, %arg1 : i32, i32
  }
  func.func @transform_2(%arg0: i32, %arg1: i32, %arg2: i32) -> (i32, i32) {
    %c0_i32 = arith.constant 0 : i32
    return %arg0, %arg1 : i32, i32
  }
  func.func @transform_3(%arg0: i32, %arg1: i32, %arg2: i32) -> (i32, i32) {
    %c0_i32 = arith.constant 0 : i32
    return %arg0, %arg1 : i32, i32
  }
  func.func @transform_4(%arg0: i32, %arg1: i32, %arg2: i32) -> (i32, i32) {
    %c0_i32 = arith.constant 0 : i32
    return %arg0, %arg1 : i32, i32
  }
}

</mosaic_0001>

<llo_original>
// kernel: tpu_custom_call.1
$region0: #{tpu_custom_call.1}
  #allocation0 [shape = 'u32[]', space=smem, size = 0x4, offset = 0x4, fixed_abs, tag = 'smem constant byte address 0x4 - core index']
  #allocation1 [shape = 'u32[72,128]{1,0:T(1,128)}', space=vmem, size = 0x9000, scoped, tag = 'internal scratch']
  %s0 = inlined_call_operand.hbm [shape: f32[128,128], index: 0, kind: input, shape index: {}]
  %s1 = inlined_call_operand.hbm [shape: f32[128,128], index: 1, kind: input, shape index: {}]
  %s2 = inlined_call_operand.hbm [shape: f32[128,128], index: 2, kind: input, shape index: {}]
  %s3 = inlined_call_operand.hbm [shape: f32[128,128], index: 3, kind: output, shape index: {0}]
  %s4 = inlined_call_operand.hbm [shape: f32[8,128], index: 4, kind: output, shape index: {1}]
  %5 = xla_tuple %s3, %s4
  %s6 = sld [smem:[#allocation0]]
  $region50: #{tpu_custom_call.1} parent=0
    _
  %s8 = ssub.s32 1, %s6
  %s9 = scalar_select 0, %s8, %s6
  $region1: #{tpu_custom_call.1} parent=0
    #allocation2 [shape = 'u8[65536]{0}', space=vmem, size = 0x10000, scoped, tag = 'input window, operand 0, single buffered']
    #allocation3 [shape = 's32[1]{0}', space=sflag, size = 0x4, scoped, tag = 'scoped memory for tpu_custom_call.1']
    #allocation4 [shape = 's32[1]{0}', space=sflag, size = 0x4, scoped, tag = 'scoped memory for tpu_custom_call.1']
    #allocation5 [shape = 'u8[65536]{0}', space=vmem, size = 0x10000, scoped, tag = 'input window, operand 1, single buffered']
    #allocation6 [shape = 's32[1]{0}', space=sflag, size = 0x4, scoped, tag = 'scoped memory for tpu_custom_call.1']
    #allocation7 [shape = 'u8[65536]{0}', space=vmem, size = 0x10000, scoped, tag = 'input window, operand 2, single buffered']
    #allocation8 [shape = 'u8[65536]{0}', space=vmem, size = 0x10000, scoped, tag = 'output window, operand 0, single buffered']
    #allocation9 [shape = 'u8[4096]{0}', space=vmem, size = 0x1000, scoped, tag = 'output window, operand 1, single buffered']
    #allocation10 [shape = 's32[1]{0}', space=sflag, size = 0x4, scoped, tag = 'scoped memory for tpu_custom_call.1']
    %10 = vsyncpa [#allocation3], 0
    %11 = vsyncpa [#allocation6], 0
    %12 = vsyncpa [#allocation4], 0
    %13 = vsyncpa [#allocation10], 0
    // Predicated region
    $region2: #{tpu_custom_call.1} parent=1 // pred_check
      _
    $region3: #{tpu_custom_call.1} parent=1 // pred_check_branch
      %15 = sbr.rel (0) target = $region5
    $region4: #{tpu_custom_call.1} parent=1 // pred_region
      %17 = vsyncadd [#allocation3], 0
      %s18 = sshll.u32 %s0, 4
      %s19 = int_to_ptr.hbm [resolvable:$true] %s18
      %s20 = sshll.u32 [#allocation2], 4
      %s21 = int_to_ptr.vmem [resolvable:$true] %s20
      %26 = dma.hbm_to_vmem [thread:$0]  %s19, 2048, %s21, [#allocation3], 128, 128, 8
    $region5: #{tpu_custom_call.1} parent=1 // pred_fallthru
      _
    // Predicated region
    $region6: #{tpu_custom_call.1} parent=1 // pred_check
      _
    $region7: #{tpu_custom_call.1} parent=1 // pred_check_branch
      %28 = sbr.rel (0) target = $region9
    $region8: #{tpu_custom_call.1} parent=1 // pred_region
      %30 = vsyncadd [#allocation6], 0
      %s31 = sshll.u32 %s1, 4
      %s32 = int_to_ptr.hbm [resolvable:$true] %s31
      %s33 = sshll.u32 [#allocation5], 4
      %s34 = int_to_ptr.vmem [resolvable:$true] %s33
      %39 = dma.hbm_to_vmem [thread:$0]  %s32, 2048, %s34, [#allocation6], 128, 128, 8
    $region9: #{tpu_custom_call.1} parent=1 // pred_fallthru
      _
    // Predicated region
    $region10: #{tpu_custom_call.1} parent=1 // pred_check
      _
    $region11: #{tpu_custom_call.1} parent=1 // pred_check_branch
      %41 = sbr.rel (0) target = $region13
    $region12: #{tpu_custom_call.1} parent=1 // pred_region
      %43 = vsyncadd [#allocation6], 0
      %s44 = sshll.u32 %s2, 4
      %s45 = int_to_ptr.hbm [resolvable:$true] %s44
      %s46 = sshll.u32 [#allocation7], 4
      %s47 = int_to_ptr.vmem [resolvable:$true] %s46
      %52 = dma.hbm_to_vmem [thread:$0]  %s45, 2048, %s47, [#allocation6], 128, 128, 8
    $region13: #{tpu_custom_call.1} parent=1 // pred_fallthru
      _
    // Predicated region
    $region14: #{tpu_custom_call.1} parent=1 // pred_check
      _
    $region15: #{tpu_custom_call.1} parent=1 // pred_check_branch
      %54 = sbr.rel (0) target = $region17
    $region16: #{tpu_custom_call.1} parent=1 // pred_region
      %56 = dma.done [#allocation3], 2048
    $region17: #{tpu_custom_call.1} parent=1 // pred_fallthru
      _
    // Predicated region
    $region18: #{tpu_custom_call.1} parent=1 // pred_check
      _
    $region19: #{tpu_custom_call.1} parent=1 // pred_check_branch
      %58 = sbr.rel (0) target = $region21
    $region20: #{tpu_custom_call.1} parent=1 // pred_region
      %60 = dma.done [#allocation6], 2048
    $region21: #{tpu_custom_call.1} parent=1 // pred_fallthru
      _
    // Predicated region
    $region22: #{tpu_custom_call.1} parent=1 // pred_check
      _
    $region23: #{tpu_custom_call.1} parent=1 // pred_check_branch
      %62 = sbr.rel (0) target = $region25
    $region24: #{tpu_custom_call.1} parent=1 // pred_region
      %64 = dma.done [#allocation6], 2048
    $region25: #{tpu_custom_call.1} parent=1 // pred_fallthru
      _
    %p65 = scmp.eq.s32.totalorder 0, 0
    // Predicated region
    $region26: #{tpu_custom_call.1} parent=1 // pred_check
      %p66 = pneg %p65
    $region27: #{tpu_custom_call.1} parent=1 // pred_check_branch
      %68 = sbr.rel (%p66) target = $region29
    $region28: #{tpu_custom_call.1} parent=1 // pred_region
      %69 = vst [vmem:[#allocation8] sm:$0xff] 0.0
      %70 = vst [vmem:[#allocation8 + $0x8] sm:$0xff] 0.0
      %71 = vst [vmem:[#allocation8 + $0x10] sm:$0xff] 0.0
      %72 = vst [vmem:[#allocation8 + $0x18] sm:$0xff] 0.0
      %73 = vst [vmem:[#allocation8 + $0x20] sm:$0xff] 0.0
      %74 = vst [vmem:[#allocation8 + $0x28] sm:$0xff] 0.0
      %75 = vst [vmem:[#allocation8 + $0x30] sm:$0xff] 0.0
      %76 = vst [vmem:[#allocation8 + $0x38] sm:$0xff] 0.0
      %77 = vst [vmem:[#allocation8 + $0x40] sm:$0xff] 0.0
      %78 = vst [vmem:[#allocation8 + $0x48] sm:$0xff] 0.0
      %79 = vst [vmem:[#allocation8 + $0x50] sm:$0xff] 0.0
      %80 = vst [vmem:[#allocation8 + $0x58] sm:$0xff] 0.0
      %81 = vst [vmem:[#allocation8 + $0x60] sm:$0xff] 0.0
      %82 = vst [vmem:[#allocation8 + $0x68] sm:$0xff] 0.0
      %83 = vst [vmem:[#allocation8 + $0x70] sm:$0xff] 0.0
      %84 = vst [vmem:[#allocation8 + $0x78] sm:$0xff] 0.0
    $region29: #{tpu_custom_call.1} parent=1 // pred_fallthru
      _
    %v85 = vld [vmem:[#allocation8] sm:$0xff]
    %v86 = vld [vmem:[#allocation8 + $0x8] sm:$0xff]
    %v87 = vld [vmem:[#allocation8 + $0x10] sm:$0xff]
    %v88 = vld [vmem:[#allocation8 + $0x18] sm:$0xff]
    %v89 = vld [vmem:[#allocation8 + $0x20] sm:$0xff]
    %v90 = vld [vmem:[#allocation8 + $0x28] sm:$0xff]
    %v91 = vld [vmem:[#allocation8 + $0x30] sm:$0xff]
    %v92 = vld [vmem:[#allocation8 + $0x38] sm:$0xff]
    %v93 = vld [vmem:[#allocation8 + $0x40] sm:$0xff]
    %v94 = vld [vmem:[#allocation8 + $0x48] sm:$0xff]
    %v95 = vld [vmem:[#allocation8 + $0x50] sm:$0xff]
    %v96 = vld [vmem:[#allocation8 + $0x58] sm:$0xff]
    %v97 = vld [vmem:[#allocation8 + $0x60] sm:$0xff]
    %v98 = vld [vmem:[#allocation8 + $0x68] sm:$0xff]
    %v99 = vld [vmem:[#allocation8 + $0x70] sm:$0xff]
    %v100 = vld [vmem:[#allocation8 + $0x78] sm:$0xff]
    %v101 = vld [vmem:[#allocation2] sm:$0xff]
    %v102 = vld [vmem:[#allocation2 + $0x8] sm:$0xff]
    %v103 = vld [vmem:[#allocation2 + $0x10] sm:$0xff]
    %v104 = vld [vmem:[#allocation2 + $0x18] sm:$0xff]
    %v105 = vld [vmem:[#allocation2 + $0x20] sm:$0xff]
    %v106 = vld [vmem:[#allocation2 + $0x28] sm:$0xff]
    %v107 = vld [vmem:[#allocation2 + $0x30] sm:$0xff]
    %v108 = vld [vmem:[#allocation2 + $0x38] sm:$0xff]
    %v109 = vld [vmem:[#allocation2 + $0x40] sm:$0xff]
    %v110 = vld [vmem:[#allocation2 + $0x48] sm:$0xff]
    %v111 = vld [vmem:[#allocation2 + $0x50] sm:$0xff]
    %v112 = vld [vmem:[#allocation2 + $0x58] sm:$0xff]
    %v113 = vld [vmem:[#allocation2 + $0x60] sm:$0xff]
    %v114 = vld [vmem:[#allocation2 + $0x68] sm:$0xff]
    %v115 = vld [vmem:[#allocation2 + $0x70] sm:$0xff]
    %v116 = vld [vmem:[#allocation2 + $0x78] sm:$0xff]
    %v117 = vld [vmem:[#allocation5] sm:$0xff]
    %v118 = vld [vmem:[#allocation5 + $0x8] sm:$0xff]
    %v119 = vld [vmem:[#allocation5 + $0x10] sm:$0xff]
    %v120 = vld [vmem:[#allocation5 + $0x18] sm:$0xff]
    %v121 = vld [vmem:[#allocation5 + $0x20] sm:$0xff]
    %v122 = vld [vmem:[#allocation5 + $0x28] sm:$0xff]
    %v123 = vld [vmem:[#allocation5 + $0x30] sm:$0xff]
    %v124 = vld [vmem:[#allocation5 + $0x38] sm:$0xff]
    %v125 = vld [vmem:[#allocation5 + $0x40] sm:$0xff]
    %v126 = vld [vmem:[#allocation5 + $0x48] sm:$0xff]
    %v127 = vld [vmem:[#allocation5 + $0x50] sm:$0xff]
    %v128 = vld [vmem:[#allocation5 + $0x58] sm:$0xff]
    %v129 = vld [vmem:[#allocation5 + $0x60] sm:$0xff]
    %v130 = vld [vmem:[#allocation5 + $0x68] sm:$0xff]
    %v131 = vld [vmem:[#allocation5 + $0x70] sm:$0xff]
    %v132 = vld [vmem:[#allocation5 + $0x78] sm:$0xff]
    %133 = vmatpush.msra.mxu0 %v132
    %134 = vmatpush.msra.mxu0 %v131
    %135 = vmatpush.msra.mxu0 %v130
    %136 = vmatpush.msra.mxu0 %v129
    %137 = vmatpush.msra.mxu0 %v128
    %138 = vmatpush.msra.mxu0 %v127
    %139 = vmatpush.msra.mxu0 %v126
    %140 = vmatpush.msra.mxu0 %v125
    %141 = vmatpush.msra.mxu0 %v124
    %142 = vmatpush.msra.mxu0 %v123
    %143 = vmatpush.msra.mxu0 %v122
    %144 = vmatpush.msra.mxu0 %v121
    %145 = vmatpush.msra.mxu0 %v120
    %146 = vmatpush.msra.mxu0 %v119
    %147 = vmatpush.msra.mxu0 %v118
    %148 = vmatpush.msra.mxu0 %v117
    %149 = vmatmul.f32.gmra.mxu0 %v101
    %v150 = vpop.f32.mrf.mxu0
    %v151 = vadd.f32 0.0, %v150
    %152 = vmatmul.f32.gmra.mxu0 %v102
    %v153 = vpop.f32.mrf.mxu0
    %v154 = vadd.f32 0.0, %v153
    %155 = vmatmul.f32.gmra.mxu0 %v103
    %v156 = vpop.f32.mrf.mxu0
    %v157 = vadd.f32 0.0, %v156
    %158 = vmatmul.f32.gmra.mxu0 %v104
    %v159 = vpop.f32.mrf.mxu0
    %v160 = vadd.f32 0.0, %v159
    %161 = vmatmul.f32.gmra.mxu0 %v105
    %v162 = vpop.f32.mrf.mxu0
    %v163 = vadd.f32 0.0, %v162
    %164 = vmatmul.f32.gmra.mxu0 %v106
    %v165 = vpop.f32.mrf.mxu0
    %v166 = vadd.f32 0.0, %v165
    %167 = vmatmul.f32.gmra.mxu0 %v107
    %v168 = vpop.f32.mrf.mxu0
    %v169 = vadd.f32 0.0, %v168
    %170 = vmatmul.f32.gmra.mxu0 %v108
    %v171 = vpop.f32.mrf.mxu0
    %v172 = vadd.f32 0.0, %v171
    %173 = vmatmul.f32.gmra.mxu0 %v109
    %v174 = vpop.f32.mrf.mxu0
    %v175 = vadd.f32 0.0, %v174
    %176 = vmatmul.f32.gmra.mxu0 %v110
    %v177 = vpop.f32.mrf.mxu0
    %v178 = vadd.f32 0.0, %v177
    %179 = vmatmul.f32.gmra.mxu0 %v111
    %v180 = vpop.f32.mrf.mxu0
    %v181 = vadd.f32 0.0, %v180
    %182 = vmatmul.f32.gmra.mxu0 %v112
    %v183 = vpop.f32.mrf.mxu0
    %v184 = vadd.f32 0.0, %v183
    %185 = vmatmul.f32.gmra.mxu0 %v113
    %v186 = vpop.f32.mrf.mxu0
    %v187 = vadd.f32 0.0, %v186
    %188 = vmatmul.f32.gmra.mxu0 %v114
    %v189 = vpop.f32.mrf.mxu0
    %v190 = vadd.f32 0.0, %v189
    %191 = vmatmul.f32.gmra.mxu0 %v115
    %v192 = vpop.f32.mrf.mxu0
    %v193 = vadd.f32 0.0, %v192
    %194 = vmatmul.f32.gmra.mxu0 %v116
    %v195 = vpop.f32.mrf.mxu0
    %v196 = vadd.f32 0.0, %v195
    %197 = vdwg.mxu0
    %v198 = vadd.f32 %v85, %v151
    %v199 = vadd.f32 %v86, %v154
    %v200 = vadd.f32 %v87, %v157
    %v201 = vadd.f32 %v88, %v160
    %v202 = vadd.f32 %v89, %v163
    %v203 = vadd.f32 %v90, %v166
    %v204 = vadd.f32 %v91, %v169
    %v205 = vadd.f32 %v92, %v172
    %v206 = vadd.f32 %v93, %v175
    %v207 = vadd.f32 %v94, %v178
    %v208 = vadd.f32 %v95, %v181
    %v209 = vadd.f32 %v96, %v184
    %v210 = vadd.f32 %v97, %v187
    %v211 = vadd.f32 %v98, %v190
    %v212 = vadd.f32 %v99, %v193
    %v213 = vadd.f32 %v100, %v196
    %214 = vst [vmem:[#allocation8] sm:$0xff] %v198
    %215 = vst [vmem:[#allocation8 + $0x8] sm:$0xff] %v199
    %216 = vst [vmem:[#allocation8 + $0x10] sm:$0xff] %v200
    %217 = vst [vmem:[#allocation8 + $0x18] sm:$0xff] %v201
    %218 = vst [vmem:[#allocation8 + $0x20] sm:$0xff] %v202
    %219 = vst [vmem:[#allocation8 + $0x28] sm:$0xff] %v203
    %220 = vst [vmem:[#allocation8 + $0x30] sm:$0xff] %v204
    %221 = vst [vmem:[#allocation8 + $0x38] sm:$0xff] %v205
    %222 = vst [vmem:[#allocation8 + $0x40] sm:$0xff] %v206
    %223 = vst [vmem:[#allocation8 + $0x48] sm:$0xff] %v207
    %224 = vst [vmem:[#allocation8 + $0x50] sm:$0xff] %v208
    %225 = vst [vmem:[#allocation8 + $0x58] sm:$0xff] %v209
    %226 = vst [vmem:[#allocation8 + $0x60] sm:$0xff] %v210
    %227 = vst [vmem:[#allocation8 + $0x68] sm:$0xff] %v211
    %228 = vst [vmem:[#allocation8 + $0x70] sm:$0xff] %v212
    %229 = vst [vmem:[#allocation8 + $0x78] sm:$0xff] %v213
    // Predicated region
    $region30: #{tpu_custom_call.1} parent=1 // pred_check
      %p230 = pneg %p65
    $region31: #{tpu_custom_call.1} parent=1 // pred_check_branch
      %232 = sbr.rel (%p230) target = $region33
    $region32: #{tpu_custom_call.1} parent=1 // pred_region
      %v233 = vld [vmem:[#allocation8] sm:$0xff]
      %v234 = vld [vmem:[#allocation8 + $0x8] sm:$0xff]
      %v235 = vld [vmem:[#allocation8 + $0x10] sm:$0xff]
      %v236 = vld [vmem:[#allocation8 + $0x18] sm:$0xff]
      %v237 = vld [vmem:[#allocation8 + $0x20] sm:$0xff]
      %v238 = vld [vmem:[#allocation8 + $0x28] sm:$0xff]
      %v239 = vld [vmem:[#allocation8 + $0x30] sm:$0xff]
      %v240 = vld [vmem:[#allocation8 + $0x38] sm:$0xff]
      %v241 = vld [vmem:[#allocation8 + $0x40] sm:$0xff]
      %v242 = vld [vmem:[#allocation8 + $0x48] sm:$0xff]
      %v243 = vld [vmem:[#allocation8 + $0x50] sm:$0xff]
      %v244 = vld [vmem:[#allocation8 + $0x58] sm:$0xff]
      %v245 = vld [vmem:[#allocation8 + $0x60] sm:$0xff]
      %v246 = vld [vmem:[#allocation8 + $0x68] sm:$0xff]
      %v247 = vld [vmem:[#allocation8 + $0x70] sm:$0xff]
      %v248 = vld [vmem:[#allocation8 + $0x78] sm:$0xff]
      %v249 = vld [vmem:[#allocation7] sm:$0xff]
      %v250 = vld [vmem:[#allocation7 + $0x8] sm:$0xff]
      %v251 = vld [vmem:[#allocation7 + $0x10] sm:$0xff]
      %v252 = vld [vmem:[#allocation7 + $0x18] sm:$0xff]
      %v253 = vld [vmem:[#allocation7 + $0x20] sm:$0xff]
      %v254 = vld [vmem:[#allocation7 + $0x28] sm:$0xff]
      %v255 = vld [vmem:[#allocation7 + $0x30] sm:$0xff]
      %v256 = vld [vmem:[#allocation7 + $0x38] sm:$0xff]
      %v257 = vld [vmem:[#allocation7 + $0x40] sm:$0xff]
      %v258 = vld [vmem:[#allocation7 + $0x48] sm:$0xff]
      %v259 = vld [vmem:[#allocation7 + $0x50] sm:$0xff]
      %v260 = vld [vmem:[#allocation7 + $0x58] sm:$0xff]
      %v261 = vld [vmem:[#allocation7 + $0x60] sm:$0xff]
      %v262 = vld [vmem:[#allocation7 + $0x68] sm:$0xff]
      %v263 = vld [vmem:[#allocation7 + $0x70] sm:$0xff]
      %v264 = vld [vmem:[#allocation7 + $0x78] sm:$0xff]
      %vm265 = vcmp.le.f32.partialorder %v249, %v233
      %vm266 = vcmp.le.f32.partialorder %v250, %v234
      %vm267 = vcmp.le.f32.partialorder %v251, %v235
      %vm268 = vcmp.le.f32.partialorder %v252, %v236
      %vm269 = vcmp.le.f32.partialorder %v253, %v237
      %vm270 = vcmp.le.f32.partialorder %v254, %v238
      %vm271 = vcmp.le.f32.partialorder %v255, %v239
      %vm272 = vcmp.le.f32.partialorder %v256, %v240
      %vm273 = vcmp.le.f32.partialorder %v257, %v241
      %vm274 = vcmp.le.f32.partialorder %v258, %v242
      %vm275 = vcmp.le.f32.partialorder %v259, %v243
      %vm276 = vcmp.le.f32.partialorder %v260, %v244
      %vm277 = vcmp.le.f32.partialorder %v261, %v245
      %vm278 = vcmp.le.f32.partialorder %v262, %v246
      %vm279 = vcmp.le.f32.partialorder %v263, %v247
      %vm280 = vcmp.le.f32.partialorder %v264, %v248
      %v281 = vsel %vm265, 0.0, 1.0
      %v282 = vsel %vm266, 0.0, 1.0
      %v283 = vsel %vm267, 0.0, 1.0
      %v284 = vsel %vm268, 0.0, 1.0
      %v285 = vsel %vm269, 0.0, 1.0
      %v286 = vsel %vm270, 0.0, 1.0
      %v287 = vsel %vm271, 0.0, 1.0
      %v288 = vsel %vm272, 0.0, 1.0
      %v289 = vsel %vm273, 0.0, 1.0
      %v290 = vsel %vm274, 0.0, 1.0
      %v291 = vsel %vm275, 0.0, 1.0
      %v292 = vsel %vm276, 0.0, 1.0
      %v293 = vsel %vm277, 0.0, 1.0
      %v294 = vsel %vm278, 0.0, 1.0
      %v295 = vsel %vm279, 0.0, 1.0
      %v296 = vsel %vm280, 0.0, 1.0
      %v297 = vmin.f32 %v281, %v285
      %v298 = vmin.f32 %v282, %v286
      %v299 = vmin.f32 %v283, %v287
      %v300 = vmin.f32 %v284, %v288
      %v301 = vmin.f32 %v297, %v289
      %v302 = vmin.f32 %v298, %v290
      %v303 = vmin.f32 %v299, %v291
      %v304 = vmin.f32 %v300, %v292
      %v305 = vmin.f32 %v301, %v293
      %v306 = vmin.f32 %v302, %v294
      %v307 = vmin.f32 %v303, %v295
      %v308 = vmin.f32 %v304, %v296
      %v309 = vmin.f32 %v305, %v306
      %v310 = vmin.f32 %v307, %v308
      %v311 = vmin.f32 %v309, %v310
      %312 = vmin.xlane.f32.xlu0 %v311
      %v313 = vpop.xlane.xlu0 %312
      %v314 = vrot.slane %v313, 4
      %v315 = vmin.f32 %v313, %v314
      %v316 = vrot.slane %v315, 2
      %v317 = vmin.f32 %v315, %v316
      %v318 = vrot.slane %v317, 1
      %v319 = vmin.f32 %v317, %v318
      %s320 = vtos %v319
      %v321 = vstv %s320
      %322 = vst [vmem:[#allocation9] sm:$0xff] %v321
    $region33: #{tpu_custom_call.1} parent=1 // pred_fallthru
      _
    // Predicated region
    $region34: #{tpu_custom_call.1} parent=1 // pred_check
      _
    $region35: #{tpu_custom_call.1} parent=1 // pred_check_branch
      %324 = sbr.rel (0) target = $region37
    $region36: #{tpu_custom_call.1} parent=1 // pred_region
      %326 = vsyncadd [#allocation4], 0
      %s327 = sshll.u32 [#allocation8], 4
      %s328 = int_to_ptr.vmem [resolvable:$true] %s327
      %s329 = sshll.u32 %s3, 4
      %s330 = int_to_ptr.hbm [resolvable:$true] %s329
      %335 = dma.vmem_to_hbm [thread:$0]  %s328, 2048, %s330, [#allocation4], 128, 128, 8
    $region37: #{tpu_custom_call.1} parent=1 // pred_fallthru
      _
    // Predicated region
    $region38: #{tpu_custom_call.1} parent=1 // pred_check
      _
    $region39: #{tpu_custom_call.1} parent=1 // pred_check_branch
      %337 = sbr.rel (0) target = $region41
    $region40: #{tpu_custom_call.1} parent=1 // pred_region
      %339 = vsyncadd [#allocation10], 0
      %s341 = sshll.u32 [#allocation9], 4
      %s342 = int_to_ptr.vmem [resolvable:$true] %s341
      %s343 = sshll.u32 %s4, 4
      %s344 = int_to_ptr.hbm [resolvable:$true] %s343
      %346 = dma.vmem_to_hbm [thread:$0]  %s342, 128, %s344, [#allocation10]
    $region41: #{tpu_custom_call.1} parent=1 // pred_fallthru
      _
    // Predicated region
    $region42: #{tpu_custom_call.1} parent=1 // pred_check
      _
    $region43: #{tpu_custom_call.1} parent=1 // pred_check_branch
      %348 = sbr.rel (0) target = $region45
    $region44: #{tpu_custom_call.1} parent=1 // pred_region
      %350 = dma.done [#allocation4], 2048
    $region45: #{tpu_custom_call.1} parent=1 // pred_fallthru
      _
    // Predicated region
    $region46: #{tpu_custom_call.1} parent=1 // pred_check
      _
    $region47: #{tpu_custom_call.1} parent=1 // pred_check_branch
      %352 = sbr.rel (0) target = $region49
    $region48: #{tpu_custom_call.1} parent=1 // pred_region
      %354 = dma.done [#allocation10], 128
    $region49: #{tpu_custom_call.1} parent=1 // pred_fallthru
      _
    %355 = vsyncpa [#allocation3], 1
    %356 = vsyncpa [#allocation6], 1
    %357 = vsyncpa [#allocation4], 1
    %358 = vsyncpa [#allocation10], 1

</llo_original>
